<compile_context>
chip_gen: v7x
topology: tpu7x:2x2x1
jax: 0.10.0
libtpu: 0.0.40
codegen_flags: <defaults>
</compile_context>

<pallas_src>
import jax
import jax.numpy as jnp
from jax.experimental import pallas as pl
from jax.experimental.pallas import tpu as pltpu

# ---- synthetic config (opt) ----
D = 2            # num_decoder = len(modality) - sum(skip_info)
B = 2            # batch size
S = 8            # encoder seq len
H = 32           # dim_hidden == word_size == feats_size (num_modality=1 per decoder)
M = 32           # att_mid_size
VOCAB = 50       # vocab_size
T = 4            # decode steps folded into the kernel grid
FORGET_BIAS = 0.6  # opt['forget_bias']; +FB/2 on bias_ih and bias_hh each -> +FB total

DH = D * H       # packed hidden width (decoder-major lanes)
DM = D * M       # packed attention-mid width
G4 = 4 * DH      # packed gate width (gate-major / decoder-minor)
W2N = 128        # lane-padded N for the block-diagonal w2 matmul
W_COLS = G4      # 256 lanes for the single weight slab


def _r8(x):
    return (x + 7) // 8 * 8


# row offsets inside the single packed weight slab [R_END, W_COLS] (8-aligned)
R_WEMB = 0                    # [H,  G4]  shared word-emb rows of W_ih
R_WCTX = R_WEMB + H           # [DH, G4]  context rows (block-structured per decoder)
R_WH = R_WCTX + DH            # [DH, G4]  hidden rows  (block-structured per decoder)
R_BL = R_WH + DH              # [1,  G4]  b_ih + b_hh  (forget bias folded)
R_W1H = _r8(R_BL + 1)         # [DH, DM]  block-diag attention W1h
R_W1F = R_W1H + DH            # [H,  DM]  attention W1f
R_BA = R_W1F + H              # [1,  DM]  b1h + b1f
R_W2 = _r8(R_BA + 1)          # [DM, W2N] block-diag w2 (cols 0:D live, rest zero)
R_END = R_W2 + DM


def _ensemble_decoder_kernel(emb_ref, feats_ref, hc0_ref, w_ref,
                             hc_out_ref, attn_out_ref, hc_scr):
    t = pl.program_id(0)

    @pl.when(t == 0)
    def _():
        hc_scr[...] = hc0_ref[...]                     # [B, 2*DH]: h | c

    emb = emb_ref[0]                                   # [B, H]  word embedding at step t
    feats = feats_ref[...]                             # [B, S, H]
    feats2d = feats.reshape(B * S, H)                  # no-op collapse (S == sublane tile)
    h_cat = hc_scr[:, 0:DH]                            # [B, DH] decoder-major lanes
    c_cat = hc_scr[:, DH:2 * DH]                       # [B, DH]

    # ---- Attentional_Attention for ALL decoders ----
    ph = jnp.dot(h_cat, w_ref[R_W1H:R_W1H + DH, 0:DM],
                 preferred_element_type=jnp.float32)                       # [B, DM]
    pf = (jnp.dot(feats2d, w_ref[R_W1F:R_W1F + H, 0:DM],
                  preferred_element_type=jnp.float32)
          + w_ref[R_BA:R_BA + 1, 0:DM])                                    # [B*S, DM]
    z = jnp.tanh(ph[:, None, :] + pf.reshape(B, S, DM))                    # [B, S, DM]
    # block-diagonal w2 on the MXU -> per-decoder scores in lanes 0:D (pad lanes are 0)
    scores = jnp.dot(z.reshape(B * S, DM), w_ref[R_W2:R_W2 + DM, 0:W2N],
                     preferred_element_type=jnp.float32).reshape(B, S, W2N)
    scores = scores - jnp.max(scores, axis=1, keepdims=True)
    e = jnp.exp(scores)
    probs = e * pl.reciprocal(jnp.sum(e, axis=1, keepdims=True),
                              approx=False)                                # [B, S, W2N]
    attn_out_ref[0] = probs[:, :, 0:D]                 # natural [B,S,D] layout, no relayout

    # ---- LSTMCell for ALL decoders: accumulating MXU matmuls (no input concat) ----
    gates = (jnp.dot(emb, w_ref[R_WEMB:R_WEMB + H, :],
                     preferred_element_type=jnp.float32)
             + jnp.dot(h_cat, w_ref[R_WH:R_WH + DH, :],
                       preferred_element_type=jnp.float32)
             + w_ref[R_BL:R_BL + 1, :])                                    # [B, 4*DH]
    for d in range(D):  # D=2, unrolled
        # context_d = sum_s probs[:, s, d] * feats[:, s, :]
        # TODO(synk): move this contraction onto the MXU via a transposed-lhs batched
        # dot_general once verified on Mosaic; XLU cost is negligible at this size.
        ctx_d = jnp.sum(probs[:, :, d:d + 1] * feats, axis=1)              # [B, H]
        gates = gates + jnp.dot(
            ctx_d, w_ref[R_WCTX + d * H:R_WCTX + (d + 1) * H, :],
            preferred_element_type=jnp.float32)

    # gate columns are gate-major / decoder-minor: [i_* | f_* | g_* | o_*]
    sig = jax.nn.sigmoid(gates)                        # one EUP pass over the full tile
    i_g = sig[:, 0:DH]
    f_g = sig[:, DH:2 * DH]
    g_g = jnp.tanh(gates[:, 2 * DH:3 * DH])
    o_g = sig[:, 3 * DH:4 * DH]
    c_new = f_g * c_cat + i_g * g_g                                        # [B, DH]
    h_new = o_g * jnp.tanh(c_new)                                          # [B, DH]

    hc_scr[:, 0:DH] = h_new                            # carry state across grid steps
    hc_scr[:, DH:2 * DH] = c_new
    hc_out_ref[0] = hc_scr[...]                        # single unmasked 128-lane store


@jax.jit
def _run_kernel(emb_seq, feats, hc0, w_all):
    steps = emb_seq.shape[0]
    return pl.pallas_call(
        _ensemble_decoder_kernel,
        out_shape=(jax.ShapeDtypeStruct((steps, B, 2 * DH), jnp.float32),
                   jax.ShapeDtypeStruct((steps, B, S, D), jnp.float32)),
        grid_spec=pltpu.PrefetchScalarGridSpec(
            num_scalar_prefetch=0,
            grid=(steps,),
            in_specs=[
                pl.BlockSpec((1, B, H), lambda t: (t, 0, 0)),       # per-step embedding
                pl.BlockSpec((B, S, H), lambda t: (0, 0, 0)),       # feats: resident
                pl.BlockSpec((B, 2 * DH), lambda t: (0, 0)),        # initial h|c: resident
                pl.BlockSpec((R_END, W_COLS), lambda t: (0, 0)),    # weight slab: resident
            ],
            out_specs=[
                pl.BlockSpec((1, B, 2 * DH), lambda t: (t, 0, 0)),
                pl.BlockSpec((1, B, S, D), lambda t: (t, 0, 0, 0)),
            ],
            scratch_shapes=[pltpu.VMEM((B, 2 * DH), jnp.float32)],  # carried h|c state
        ),
        compiler_params=pltpu.CompilerParams(
            dimension_semantics=("arbitrary",)),       # true recurrence over time
    )(emb_seq, feats, hc0, w_all)


def pack_params(p):
    """One-time re-layout of per-decoder (transposed, PyTorch-style) weights into a
    single [R_END, W_COLS] f32 slab.  Plain JAX, outside the kernel."""
    w = jnp.zeros((R_END, W_COLS), jnp.float32)
    for d in range(D):
        for g in range(4):                              # PyTorch gate order i, f, g, o
            dst = slice(g * DH + d * H, g * DH + (d + 1) * H)
            src = slice(g * H, (g + 1) * H)
            w = w.at[R_WEMB:R_WEMB + H, dst].set(p['wih_w'][d][:, src])
            w = w.at[R_WCTX + d * H:R_WCTX + (d + 1) * H, dst].set(p['wih_c'][d][:, src])
            w = w.at[R_WH + d * H:R_WH + (d + 1) * H, dst].set(p['whh'][d][:, src])
            w = w.at[R_BL, dst].set(p['bias'][d, 0, src])
        w = w.at[R_W1H + d * H:R_W1H + (d + 1) * H, d * M:(d + 1) * M].set(p['w1h'][d])
        w = w.at[R_W1F:R_W1F + H, d * M:(d + 1) * M].set(p['w1f'][d])
        w = w.at[R_BA, d * M:(d + 1) * M].set(p['b1h'][d, 0] + p['b1f'][d, 0])
        w = w.at[R_W2 + d * M:R_W2 + (d + 1) * M, d].set(p['w2'][d, 0])
    return dict(emb_table=p['emb_table'], w_all=w)


def ensemble_decoder_forward(it_seq, feats, h0, c0, packed):
    """Teacher-forced multi-step decode.
    it_seq: [T,B] int32; feats: [B,S,H] f32; h0,c0: [D,B,H] f32.
    Returns (outputs [T,D,B,H], (h_seq, c_seq), frames_weight [T,D,B,S]); each
    t-slice matches ENSEMBLE_Decoder.forward at that step (dropout = identity)."""
    emb_seq = packed['emb_table'][it_seq].astype(jnp.float32)          # [T, B, H] (glue)
    h_cat = jnp.transpose(h0, (1, 0, 2)).reshape(B, DH)                # decoder-major lanes
    c_cat = jnp.transpose(c0, (1, 0, 2)).reshape(B, DH)
    hc0 = jnp.concatenate([h_cat, c_cat], axis=-1)                     # [B, 2*DH]

    hc_seq, attn_seq = _run_kernel(emb_seq, feats, hc0, packed['w_all'])

    steps = it_seq.shape[0]
    h_seq = jnp.transpose(hc_seq[:, :, 0:DH].reshape(steps, B, D, H), (0, 2, 1, 3))
    c_seq = jnp.transpose(hc_seq[:, :, DH:2 * DH].reshape(steps, B, D, H), (0, 2, 1, 3))
    fw_seq = jnp.transpose(attn_seq, (0, 3, 1, 2))                     # [T, D, B, S]
    # outputs[t][i] = dropout(h_seq[t][i]) == h_seq[t][i] in eval mode
    return h_seq, (h_seq, c_seq), fw_seq


def init_params(key):
    ks = jax.random.split(key, 10)
    sc = 0.1
    emb_table = sc * jax.random.normal(ks[0], (VOCAB, H), jnp.float32)
    w1h = sc * jax.random.normal(ks[1], (D, H, M), jnp.float32)
    b1h = sc * jax.random.normal(ks[2], (D, 1, M), jnp.float32)
    w1f = sc * jax.random.normal(ks[3], (D, H, M), jnp.float32)
    b1f = sc * jax.random.normal(ks[4], (D, 1, M), jnp.float32)
    w2 = sc * jax.random.normal(ks[5], (D, 1, M), jnp.float32)
    wih_w = sc * jax.random.normal(ks[6], (D, H, 4 * H), jnp.float32)
    wih_c = sc * jax.random.normal(ks[7], (D, H, 4 * H), jnp.float32)
    whh = sc * jax.random.normal(ks[8], (D, H, 4 * H), jnp.float32)
    bias = sc * jax.random.normal(ks[9], (D, 1, 4 * H), jnp.float32)
    # _init_lstm_forget_bias: forget gate slice of (b_ih + b_hh) gets +forget_bias total
    bias = bias.at[:, :, H:2 * H].add(FORGET_BIAS)
    return dict(emb_table=emb_table, w1h=w1h, b1h=b1h, w1f=w1f, b1f=b1f, w2=w2,
                wih_w=wih_w, wih_c=wih_c, whh=whh, bias=bias)


def reference_forward(it_seq, feats, h0, c0, p):
    steps = it_seq.shape[0]
    h = [h0[d] for d in range(D)]
    c = [c0[d] for d in range(D)]
    hs, cs, fws = [], [], []
    for t in range(steps):
        emb = p['emb_table'][it_seq[t]]
        h_t, c_t, fw_t = [], [], []
        for d in range(D):
            ph = h[d] @ p['w1h'][d] + p['b1h'][d]
            pf = jnp.einsum('bsh,hm->bsm', feats, p['w1f'][d]) + p['b1f'][d]
            z = jnp.tanh(ph[:, None, :] + pf)
            scores = jnp.sum(z * p['w2'][d], axis=-1)
            attn = jax.nn.softmax(scores, axis=1)
            ctx = jnp.einsum('bs,bsh->bh', attn, feats)
            gates = (emb @ p['wih_w'][d] + ctx @ p['wih_c'][d]
                     + h[d] @ p['whh'][d] + p['bias'][d])
            i_g, f_g, g_g, o_g = jnp.split(gates, 4, axis=1)
            c_new = jax.nn.sigmoid(f_g) * c[d] + jax.nn.sigmoid(i_g) * jnp.tanh(g_g)
            h_new = jax.nn.sigmoid(o_g) * jnp.tanh(c_new)
            h[d], c[d] = h_new, c_new
            h_t.append(h_new); c_t.append(c_new); fw_t.append(attn)
        hs.append(jnp.stack(h_t)); cs.append(jnp.stack(c_t)); fws.append(jnp.stack(fw_t))
    return jnp.stack(hs), jnp.stack(cs), jnp.stack(fws)   # [T,D,B,H], [T,D,B,H], [T,D,B,S]


if __name__ == "__main__":
    key = jax.random.PRNGKey(0)
    kp, ki, kf, kh, kc = jax.random.split(key, 5)
    params = init_params(kp)
    packed = pack_params(params)   # one-time weight re-layout (wrapper-side)

    it_seq = jax.random.randint(ki, (T, B), 0, VOCAB, dtype=jnp.int32)    # word ids per step
    feats = jax.random.normal(kf, (B, S, H), jnp.float32)                 # encoder_outputs
    h0 = jax.random.normal(kh, (D, B, H), jnp.float32)                    # per-decoder h
    c0 = jax.random.normal(kc, (D, B, H), jnp.float32)                    # per-decoder c

    outputs, (h_seq, c_seq), frames_weight = ensemble_decoder_forward(
        it_seq, feats, h0, c0, packed)
    jax.block_until_ready((outputs, h_seq, c_seq, frames_weight))

    ref_h, ref_c, ref_fw = reference_forward(it_seq, feats, h0, c0, params)
    assert jnp.allclose(outputs, ref_h, atol=1e-4, rtol=1e-4), \
        float(jnp.max(jnp.abs(outputs - ref_h)))
    assert jnp.allclose(c_seq, ref_c, atol=1e-4, rtol=1e-4), \
        float(jnp.max(jnp.abs(c_seq - ref_c)))
    assert jnp.allclose(frames_weight, ref_fw, atol=1e-4, rtol=1e-4), \
        float(jnp.max(jnp.abs(frames_weight - ref_fw)))
    print("KERNEL_OK")
</pallas_src>

<mosaic_0001>
module attributes {stable_mosaic.version = 11 : i64} {
  func.func @_ensemble_decoder_kernel(%arg0: i32, %arg1: memref<1x2x32xf32, #tpu.memory_space<vmem>>, %arg2: memref<2x8x32xf32, #tpu.memory_space<vmem>>, %arg3: memref<2x128xf32, #tpu.memory_space<vmem>>, %arg4: memref<336x256xf32, #tpu.memory_space<vmem>>, %arg5: memref<1x2x128xf32, #tpu.memory_space<vmem>>, %arg6: memref<1x2x8x2xf32, #tpu.memory_space<vmem>>, %arg7: memref<2x128xf32, #tpu.memory_space<vmem>>) attributes {dimension_semantics = [#tpu.dimension_semantics<arbitrary>], iteration_bounds = array<i64: 4>, scalar_prefetch = 0 : i64, scratch_operands = 1 : i64, tpu.core_type = #tpu.core_type<tc>, window_params = [{transform_indices = @transform_0, window_bounds = array<i64: 1, 2, 32>}, {pipeline_mode = #tpu.pipeline_mode<synchronous>, transform_indices = @transform_1, window_bounds = array<i64: 2, 8, 32>}, {pipeline_mode = #tpu.pipeline_mode<synchronous>, transform_indices = @transform_2, window_bounds = array<i64: 2, 128>}, {pipeline_mode = #tpu.pipeline_mode<synchronous>, transform_indices = @transform_3, window_bounds = array<i64: 336, 256>}, {transform_indices = @transform_4, window_bounds = array<i64: 1, 2, 128>}, {transform_indices = @transform_5, window_bounds = array<i64: 1, 2, 8, 2>}]} {
    %c0_i32 = arith.constant 0 : i32
    %0 = arith.cmpi eq, %arg0, %c0_i32 : i32
    %1 = arith.extui %0 : i1 to i32
    %c0_i32_0 = arith.constant 0 : i32
    %2 = arith.cmpi ne, %1, %c0_i32_0 : i32
    scf.if %2 {
      %c0_44 = arith.constant 0 : index
      %c0_45 = arith.constant 0 : index
      %82 = vector.load %arg3[%c0_44, %c0_45] : memref<2x128xf32, #tpu.memory_space<vmem>>, vector<2x128xf32>
      %c0_46 = arith.constant 0 : index
      %c0_47 = arith.constant 0 : index
      %83 = vector.load %arg7[%c0_46, %c0_47] : memref<2x128xf32, #tpu.memory_space<vmem>>, vector<2x128xf32>
      tpu.vector_store %arg7[%c0_46, %c0_47], %82 {strides = array<i32>} : memref<2x128xf32, #tpu.memory_space<vmem>>, vector<2x128xf32>,
    } else {
    }
    %c0 = arith.constant 0 : index
    %c0_1 = arith.constant 0 : index
    %c0_2 = arith.constant 0 : index
    %3 = vector.load %arg1[%c0, %c0_1, %c0_2] : memref<1x2x32xf32, #tpu.memory_space<vmem>>, vector<1x2x32xf32>
    %4 = vector.shape_cast %3 : vector<1x2x32xf32> to vector<2x32xf32>
    %c0_3 = arith.constant 0 : index
    %c0_4 = arith.constant 0 : index
    %c0_5 = arith.constant 0 : index
    %5 = vector.load %arg2[%c0_3, %c0_4, %c0_5] : memref<2x8x32xf32, #tpu.memory_space<vmem>>, vector<2x8x32xf32>
    %6 = vector.shape_cast %5 : vector<2x8x32xf32> to vector<16x32xf32>
    %c0_6 = arith.constant 0 : index
    %c0_7 = arith.constant 0 : index
    %7 = vector.load %arg7[%c0_6, %c0_7] : memref<2x128xf32, #tpu.memory_space<vmem>>, vector<2x64xf32>
    %c0_8 = arith.constant 0 : index
    %c64 = arith.constant 64 : index
    %8 = vector.load %arg7[%c0_8, %c64] : memref<2x128xf32, #tpu.memory_space<vmem>>, vector<2x64xf32>
    %c168 = arith.constant 168 : index
    %c0_9 = arith.constant 0 : index
    %9 = vector.load %arg4[%c168, %c0_9] : memref<336x256xf32, #tpu.memory_space<vmem>>, vector<64x64xf32>
    %cst = arith.constant dense<0.000000e+00> : vector<2x64xf32>
    %10 = tpu.matmul %7, %9, %cst {dimension_numbers = #tpu.dot_dimension_numbers<[1], [0], [0], [1], [0, 0, 1, 1], [], []>} : vector<2x64xf32>, vector<64x64xf32>, vector<2x64xf32> -> vector<2x64xf32>
    %c232 = arith.constant 232 : index
    %c0_10 = arith.constant 0 : index
    %11 = vector.load %arg4[%c232, %c0_10] : memref<336x256xf32, #tpu.memory_space<vmem>>, vector<32x64xf32>
    %cst_11 = arith.constant dense<0.000000e+00> : vector<16x64xf32>
    %12 = tpu.matmul %6, %11, %cst_11 {dimension_numbers = #tpu.dot_dimension_numbers<[1], [0], [0], [1], [0, 0, 1, 1], [], []>} : vector<16x32xf32>, vector<32x64xf32>, vector<16x64xf32> -> vector<16x64xf32>
    %c264 = arith.constant 264 : index
    %c0_12 = arith.constant 0 : index
    %13 = vector.load %arg4[%c264, %c0_12] : memref<336x256xf32, #tpu.memory_space<vmem>>, vector<1x64xf32>
    %14 = vector.broadcast %13 : vector<1x64xf32> to vector<16x64xf32>
    %15 = arith.addf %12, %14 : vector<16x64xf32>
    %16 = vector.shape_cast %10 : vector<2x64xf32> to vector<2x1x64xf32>
    %17 = vector.shape_cast %15 : vector<16x64xf32> to vector<2x8x64xf32>
    %18 = vector.broadcast %16 : vector<2x1x64xf32> to vector<2x8x64xf32>
    %19 = arith.addf %18, %17 : vector<2x8x64xf32>
    %20 = math.tanh %19 : vector<2x8x64xf32>
    %21 = vector.shape_cast %20 : vector<2x8x64xf32> to vector<16x64xf32>
    %c272 = arith.constant 272 : index
    %c0_13 = arith.constant 0 : index
    %22 = vector.load %arg4[%c272, %c0_13] : memref<336x256xf32, #tpu.memory_space<vmem>>, vector<64x128xf32>
    %cst_14 = arith.constant dense<0.000000e+00> : vector<16x128xf32>
    %23 = tpu.matmul %21, %22, %cst_14 {dimension_numbers = #tpu.dot_dimension_numbers<[1], [0], [0], [1], [0, 0, 1, 1], [], []>} : vector<16x64xf32>, vector<64x128xf32>, vector<16x128xf32> -> vector<16x128xf32>
    %24 = vector.shape_cast %23 : vector<16x128xf32> to vector<2x8x128xf32>
    %cst_15 = arith.constant dense<0xFF800000> : vector<2x128xf32>
    %25 = vector.multi_reduction <maximumf>, %24, %cst_15 [1] : vector<2x8x128xf32> to vector<2x128xf32>
    %26 = vector.shape_cast %25 : vector<2x128xf32> to vector<2x1x128xf32>
    %27 = vector.broadcast %26 : vector<2x1x128xf32> to vector<2x8x128xf32>
    %28 = arith.subf %24, %27 : vector<2x8x128xf32>
    %29 = math.exp %28 : vector<2x8x128xf32>
    %cst_16 = arith.constant dense<0.000000e+00> : vector<2x128xf32>
    %30 = vector.multi_reduction <add>, %29, %cst_16 [1] : vector<2x8x128xf32> to vector<2x128xf32>
    %31 = vector.shape_cast %30 : vector<2x128xf32> to vector<2x1x128xf32>
    %32 = tpu.reciprocal %31 : vector<2x1x128xf32> -> vector<2x1x128xf32>
    %33 = vector.broadcast %32 : vector<2x1x128xf32> to vector<2x8x128xf32>
    %34 = arith.mulf %29, %33 : vector<2x8x128xf32>
    %35 = vector.extract_strided_slice %34 {offsets = [0, 0, 0], sizes = [2, 8, 2], strides = [1, 1, 1]} : vector<2x8x128xf32> to vector<2x8x2xf32>
    %c0_17 = arith.constant 0 : index
    %c0_18 = arith.constant 0 : index
    %c0_19 = arith.constant 0 : index
    %c0_20 = arith.constant 0 : index
    %36 = vector.load %arg6[%c0_17, %c0_18, %c0_19, %c0_20] : memref<1x2x8x2xf32, #tpu.memory_space<vmem>>, vector<1x2x8x2xf32>
    %37 = vector.shape_cast %36 : vector<1x2x8x2xf32> to vector<2x8x2xf32>
    %38 = vector.shape_cast %35 : vector<2x8x2xf32> to vector<1x2x8x2xf32>
    tpu.vector_store %arg6[%c0_17, %c0_18, %c0_19, %c0_20], %38 {strides = array<i32>} : memref<1x2x8x2xf32, #tpu.memory_space<vmem>>, vector<1x2x8x2xf32>,
    %c0_21 = arith.constant 0 : index
    %c0_22 = arith.constant 0 : index
    %39 = vector.load %arg4[%c0_21, %c0_22] : memref<336x256xf32, #tpu.memory_space<vmem>>, vector<32x256xf32>
    %cst_23 = arith.constant dense<0.000000e+00> : vector<2x256xf32>
    %40 = tpu.matmul %4, %39, %cst_23 {dimension_numbers = #tpu.dot_dimension_numbers<[1], [0], [0], [1], [0, 0, 1, 1], [], []>} : vector<2x32xf32>, vector<32x256xf32>, vector<2x256xf32> -> vector<2x256xf32>
    %c96 = arith.constant 96 : index
    %c0_24 = arith.constant 0 : index
    %41 = vector.load %arg4[%c96, %c0_24] : memref<336x256xf32, #tpu.memory_space<vmem>>, vector<64x256xf32>
    %cst_25 = arith.constant dense<0.000000e+00> : vector<2x256xf32>
    %42 = tpu.matmul %7, %41, %cst_25 {dimension_numbers = #tpu.dot_dimension_numbers<[1], [0], [0], [1], [0, 0, 1, 1], [], []>} : vector<2x64xf32>, vector<64x256xf32>, vector<2x256xf32> -> vector<2x256xf32>
    %43 = arith.addf %40, %42 : vector<2x256xf32>
    %c160 = arith.constant 160 : index
    %c0_26 = arith.constant 0 : index
    %44 = vector.load %arg4[%c160, %c0_26] : memref<336x256xf32, #tpu.memory_space<vmem>>, vector<1x256xf32>
    %45 = vector.broadcast %44 : vector<1x256xf32> to vector<2x256xf32>
    %46 = arith.addf %43, %45 : vector<2x256xf32>
    %47 = vector.extract_strided_slice %34 {offsets = [0, 0, 0], sizes = [2, 8, 1], strides = [1, 1, 1]} : vector<2x8x128xf32> to vector<2x8x1xf32>
    %48 = vector.broadcast %47 : vector<2x8x1xf32> to vector<2x8x32xf32>
    %49 = arith.mulf %48, %5 : vector<2x8x32xf32>
    %cst_27 = arith.constant dense<0.000000e+00> : vector<2x32xf32>
    %50 = vector.multi_reduction <add>, %49, %cst_27 [1] : vector<2x8x32xf32> to vector<2x32xf32>
    %c32 = arith.constant 32 : index
    %c0_28 = arith.constant 0 : index
    %51 = vector.load %arg4[%c32, %c0_28] : memref<336x256xf32, #tpu.memory_space<vmem>>, vector<32x256xf32>
    %cst_29 = arith.constant dense<0.000000e+00> : vector<2x256xf32>
    %52 = tpu.matmul %50, %51, %cst_29 {dimension_numbers = #tpu.dot_dimension_numbers<[1], [0], [0], [1], [0, 0, 1, 1], [], []>} : vector<2x32xf32>, vector<32x256xf32>, vector<2x256xf32> -> vector<2x256xf32>
    %53 = arith.addf %46, %52 : vector<2x256xf32>
    %54 = vector.extract_strided_slice %34 {offsets = [0, 0, 1], sizes = [2, 8, 1], strides = [1, 1, 1]} : vector<2x8x128xf32> to vector<2x8x1xf32>
    %55 = vector.broadcast %54 : vector<2x8x1xf32> to vector<2x8x32xf32>
    %56 = arith.mulf %55, %5 : vector<2x8x32xf32>
    %cst_30 = arith.constant dense<0.000000e+00> : vector<2x32xf32>
    %57 = vector.multi_reduction <add>, %56, %cst_30 [1] : vector<2x8x32xf32> to vector<2x32xf32>
    %c64_31 = arith.constant 64 : index
    %c0_32 = arith.constant 0 : index
    %58 = vector.load %arg4[%c64_31, %c0_32] : memref<336x256xf32, #tpu.memory_space<vmem>>, vector<32x256xf32>
    %cst_33 = arith.constant dense<0.000000e+00> : vector<2x256xf32>
    %59 = tpu.matmul %57, %58, %cst_33 {dimension_numbers = #tpu.dot_dimension_numbers<[1], [0], [0], [1], [0, 0, 1, 1], [], []>} : vector<2x32xf32>, vector<32x256xf32>, vector<2x256xf32> -> vector<2x256xf32>
    %60 = arith.addf %53, %59 : vector<2x256xf32>
    %61 = arith.negf %60 : vector<2x256xf32>
    %62 = math.exp %61 : vector<2x256xf32>
    %cst_34 = arith.constant 1.000000e+00 : f32
    %63 = vector.broadcast %cst_34 : f32 to vector<2x256xf32>
    %64 = arith.addf %63, %62 : vector<2x256xf32>
    %65 = arith.divf %63, %64 : vector<2x256xf32>
    %66 = vector.extract_strided_slice %65 {offsets = [0, 0], sizes = [2, 64], strides = [1, 1]} : vector<2x256xf32> to vector<2x64xf32>
    %67 = vector.extract_strided_slice %65 {offsets = [0, 64], sizes = [2, 64], strides = [1, 1]} : vector<2x256xf32> to vector<2x64xf32>
    %68 = vector.extract_strided_slice %60 {offsets = [0, 128], sizes = [2, 64], strides = [1, 1]} : vector<2x256xf32> to vector<2x64xf32>
    %69 = math.tanh %68 : vector<2x64xf32>
    %70 = vector.extract_strided_slice %65 {offsets = [0, 192], sizes = [2, 64], strides = [1, 1]} : vector<2x256xf32> to vector<2x64xf32>
    %71 = arith.mulf %67, %8 : vector<2x64xf32>
    %72 = arith.mulf %66, %69 : vector<2x64xf32>
    %73 = arith.addf %71, %72 : vector<2x64xf32>
    %74 = math.tanh %73 : vector<2x64xf32>
    %75 = arith.mulf %70, %74 : vector<2x64xf32>
    %c0_35 = arith.constant 0 : index
    %c0_36 = arith.constant 0 : index
    %76 = vector.load %arg7[%c0_35, %c0_36] : memref<2x128xf32, #tpu.memory_space<vmem>>, vector<2x64xf32>
    tpu.vector_store %arg7[%c0_35, %c0_36], %75 {strides = array<i32>} : memref<2x128xf32, #tpu.memory_space<vmem>>, vector<2x64xf32>,
    %c0_37 = arith.constant 0 : index
    %c64_38 = arith.constant 64 : index
    %77 = vector.load %arg7[%c0_37, %c64_38] : memref<2x128xf32, #tpu.memory_space<vmem>>, vector<2x64xf32>
    tpu.vector_store %arg7[%c0_37, %c64_38], %73 {strides = array<i32>} : memref<2x128xf32, #tpu.memory_space<vmem>>, vector<2x64xf32>,
    %c0_39 = arith.constant 0 : index
    %c0_40 = arith.constant 0 : index
    %78 = vector.load %arg7[%c0_39, %c0_40] : memref<2x128xf32, #tpu.memory_space<vmem>>, vector<2x128xf32>
    %c0_41 = arith.constant 0 : index
    %c0_42 = arith.constant 0 : index
    %c0_43 = arith.constant 0 : index
    %79 = vector.load %arg5[%c0_41, %c0_42, %c0_43] : memref<1x2x128xf32, #tpu.memory_space<vmem>>, vector<1x2x128xf32>
    %80 = vector.shape_cast %79 : vector<1x2x128xf32> to vector<2x128xf32>
    %81 = vector.shape_cast %78 : vector<2x128xf32> to vector<1x2x128xf32>
    tpu.vector_store %arg5[%c0_41, %c0_42, %c0_43], %81 {strides = array<i32>} : memref<1x2x128xf32, #tpu.memory_space<vmem>>, vector<1x2x128xf32>,
    return
  }
  func.func @transform_0(%arg0: i32) -> (i32, i32, i32) {
    %c0_i32 = arith.constant 0 : i32
    %c0_i32_0 = arith.constant 0 : i32
    %c0_i32_1 = arith.constant 0 : i32
    return %arg0, %c0_i32, %c0_i32_0 : i32, i32, i32
  }
  func.func @transform_1(%arg0: i32) -> (i32, i32, i32) {
    %c0_i32 = arith.constant 0 : i32
    %c0_i32_0 = arith.constant 0 : i32
    %c0_i32_1 = arith.constant 0 : i32
    %c0_i32_2 = arith.constant 0 : i32
    return %c0_i32, %c0_i32_0, %c0_i32_1 : i32, i32, i32
  }
  func.func @transform_2(%arg0: i32) -> (i32, i32) {
    %c0_i32 = arith.constant 0 : i32
    %c0_i32_0 = arith.constant 0 : i32
    %c0_i32_1 = arith.constant 0 : i32
    return %c0_i32, %c0_i32_0 : i32, i32
  }
  func.func @transform_3(%arg0: i32) -> (i32, i32) {
    %c0_i32 = arith.constant 0 : i32
    %c0_i32_0 = arith.constant 0 : i32
    %c0_i32_1 = arith.constant 0 : i32
    return %c0_i32, %c0_i32_0 : i32, i32
  }
  func.func @transform_4(%arg0: i32) -> (i32, i32, i32) {
    %c0_i32 = arith.constant 0 : i32
    %c0_i32_0 = arith.constant 0 : i32
    %c0_i32_1 = arith.constant 0 : i32
    return %arg0, %c0_i32, %c0_i32_0 : i32, i32, i32
  }
  func.func @transform_5(%arg0: i32) -> (i32, i32, i32, i32) {
    %c0_i32 = arith.constant 0 : i32
    %c0_i32_0 = arith.constant 0 : i32
    %c0_i32_1 = arith.constant 0 : i32
    %c0_i32_2 = arith.constant 0 : i32
    return %arg0, %c0_i32, %c0_i32_0, %c0_i32_1 : i32, i32, i32, i32
  }
}

</mosaic_0001>

<llo_original>
// kernel: _run_kernel.1
$region0: #{_run_kernel.1}
  #allocation0 [shape = 'u32[]', space=smem, size = 0x4, offset = 0x4, fixed_abs, tag = 'smem constant byte address 0x4 - core index']
  #allocation1 [shape = 'u32[144,128]{1,0:T(1,128)}', space=vmem, size = 0x12000, scoped, tag = 'internal scratch']
  #allocation2 [shape = 'f32[2,128]{1,0:T(2,128)}', space=vmem, size = 0x400, scoped, tag = 'scratch operand']
  %s0 = inlined_call_operand.hbm [shape: f32[4,2,32], index: 0, kind: input, shape index: {}]
  %s1 = inlined_call_operand.hbm [shape: f32[2,8,32], index: 1, kind: input, shape index: {}]
  %s2 = inlined_call_operand.vmem [shape: f32[2,128], index: 2, kind: input, shape index: {}]
  %s3 = inlined_call_operand.hbm [shape: f32[336,256], index: 3, kind: input, shape index: {}]
  %s4 = inlined_call_operand.hbm [shape: f32[4,2,128], index: 4, kind: output, shape index: {0}]
  %s5 = inlined_call_operand.vmem [shape: f32[4,2,8,2], index: 5, kind: output, shape index: {1}]
  %6 = xla_tuple %s4, %s5
  %s7 = sld [smem:[#allocation0]]
  $region73: #{_run_kernel.1} parent=0
    _
  %s9 = ssub.s32 1, %s7
  %s10 = scalar_select 0, %s9, %s7
  $region1: #{_run_kernel.1} parent=0
    #allocation3 [shape = 'u8[2048]{0}', space=vmem, size = 0x800, scoped, tag = 'input window, operand 0']
    #allocation4 [shape = 's32[2]{0}', space=sflag, size = 0x8, scoped, tag = 'scoped memory for _run_kernel.1']
    #allocation5 [shape = 's32[2]{0}', space=sflag, size = 0x8, scoped, tag = 'scoped memory for _run_kernel.1']
    #allocation6 [shape = 'u8[8192]{0}', space=vmem, size = 0x2000, scoped, tag = 'input window, operand 1, single buffered']
    #allocation7 [shape = 's32[1]{0}', space=sflag, size = 0x4, scoped, tag = 'scoped memory for _run_kernel.1']
    #allocation8 [shape = 'u8[344064]{0}', space=vmem, size = 0x54000, scoped, tag = 'input window, operand 3, single buffered']
    #allocation9 [shape = 'u8[2048]{0}', space=vmem, size = 0x800, scoped, tag = 'output window, operand 0']
    %11 = vsyncpa [#allocation4], 0
    %s12 = scalar_lea.sflag [#allocation4], 1
    %13 = vsyncpa %s12, 0
    %14 = vsyncpa [#allocation7], 0
    %15 = vsyncpa [#allocation5], 0
    %s16 = scalar_lea.sflag [#allocation5], 1
    %17 = vsyncpa %s16, 0
    loop: start=0, step=1, limit=6
    $region2: #{_run_kernel.1} parent=1 // loop_pre_header
      _
    $region3: #{_run_kernel.1} parent=1 // loop_header
      %s19 = sphi 0, %s23
      %p20 = scmp.ge.s32.totalorder %s19, 6
      %s29 = sphi 0, %s31
      %s32 = sphi 0, %s29
      %s33 = sphi 0, %s32
      %s49 = sphi 0, %s33
      %s53 = sphi 0, %s53
      %s55 = sphi 0, %s53
      %s56 = sphi 0, %s55
      %s70 = sphi 0, %s56
      %s74 = sphi 0, %s74
      %s76 = sphi 0, %s74
      %s77 = sphi 0, %s76
      %s91 = sphi 0, %s77
      %s95 = sphi 0, %s95
      %s97 = sphi 0, %s95
      %s98 = sphi 0, %s97
      %s112 = sphi 0, %s98
      %s118 = sphi 0, %s120
      %s121 = sphi 0, %s118
      %s122 = sphi 0, %s121
      %s138 = sphi 0, %s122
      %s144 = sphi 0, %s146
      %s147 = sphi 0, %s144
      %s148 = sphi 0, %s147
      %s164 = sphi 0, %s148
    $region4: #{_run_kernel.1} parent=1 // loop_header_branch
      %22 = sbr.rel (%p20) target = $region8
    $region5: #{_run_kernel.1} parent=1 // loop_body
      %s24 = ssub.s32 %s19, 1
      %s25 = ssub.s32 %s19, 2
      %s26 = sadd.s32 %s19, 1
      %s27 = ssub.s32 %s19, %s26
      %p28 = scmp.eq.s32.totalorder %s27, 0
      %s30 = sadd.s32 %s29, 1
      %s31 = scalar_select %p28, %s29, %s30
      %p34 = pneg %p28
      %p35 = scmp.eq.s32.totalorder %s19, 3
      %p36 = por %p34, %p35
      %p37 = scmp.ne.s32.totalorder %s29, %s32
      %p38 = scmp.eq.s32.totalorder %s19, 0
      %p39 = por %p37, %p38
      %p40 = scmp.ne.s32.totalorder %s29, %s32
      %p41 = scmp.eq.s32.totalorder %s24, 3
      %p42 = por %p40, %p41
      %p43 = scmp.ne.s32.totalorder %s32, %s33
      %p44 = scmp.eq.s32.totalorder %s24, 0
      %p45 = por %p43, %p44
      %p46 = scmp.ne.s32.totalorder %s32, %s33
      %p47 = scmp.eq.s32.totalorder %s25, 3
      %p48 = por %p46, %p47
      %p50 = scmp.ne.s32.totalorder %s33, %s49
      %p51 = scmp.eq.s32.totalorder %s25, 0
      %p52 = por %p50, %p51
      %s54 = sadd.s32 %s53, 1
      %p57 = scmp.eq.s32.totalorder %s19, 3
      %p58 = scmp.ne.s32.totalorder %s53, %s55
      %p59 = scmp.eq.s32.totalorder %s19, 0
      %p60 = por %p58, %p59
      %p61 = scmp.ne.s32.totalorder %s53, %s55
      %p62 = scmp.eq.s32.totalorder %s24, 3
      %p63 = por %p61, %p62
      %p64 = scmp.ne.s32.totalorder %s55, %s56
      %p65 = scmp.eq.s32.totalorder %s24, 0
      %p66 = por %p64, %p65
      %p67 = scmp.ne.s32.totalorder %s55, %s56
      %p68 = scmp.eq.s32.totalorder %s25, 3
      %p69 = por %p67, %p68
      %p71 = scmp.ne.s32.totalorder %s56, %s70
      %p72 = scmp.eq.s32.totalorder %s25, 0
      %p73 = por %p71, %p72
      %s75 = sadd.s32 %s74, 1
      %p78 = scmp.eq.s32.totalorder %s19, 3
      %p79 = scmp.ne.s32.totalorder %s74, %s76
      %p80 = scmp.eq.s32.totalorder %s19, 0
      %p81 = por %p79, %p80
      %p82 = scmp.ne.s32.totalorder %s74, %s76
      %p83 = scmp.eq.s32.totalorder %s24, 3
      %p84 = por %p82, %p83
      %p85 = scmp.ne.s32.totalorder %s76, %s77
      %p86 = scmp.eq.s32.totalorder %s24, 0
      %p87 = por %p85, %p86
      %p88 = scmp.ne.s32.totalorder %s76, %s77
      %p89 = scmp.eq.s32.totalorder %s25, 3
      %p90 = por %p88, %p89
      %p92 = scmp.ne.s32.totalorder %s77, %s91
      %p93 = scmp.eq.s32.totalorder %s25, 0
      %p94 = por %p92, %p93
      %s96 = sadd.s32 %s95, 1
      %p99 = scmp.eq.s32.totalorder %s19, 3
      %p100 = scmp.ne.s32.totalorder %s95, %s97
      %p101 = scmp.eq.s32.totalorder %s19, 0
      %p102 = por %p100, %p101
      %p103 = scmp.ne.s32.totalorder %s95, %s97
      %p104 = scmp.eq.s32.totalorder %s24, 3
      %p105 = por %p103, %p104
      %p106 = scmp.ne.s32.totalorder %s97, %s98
      %p107 = scmp.eq.s32.totalorder %s24, 0
      %p108 = por %p106, %p107
      %p109 = scmp.ne.s32.totalorder %s97, %s98
      %p110 = scmp.eq.s32.totalorder %s25, 3
      %p111 = por %p109, %p110
      %p113 = scmp.ne.s32.totalorder %s98, %s112
      %p114 = scmp.eq.s32.totalorder %s25, 0
      %p115 = por %p113, %p114
      %s116 = ssub.s32 %s19, %s26
      %p117 = scmp.eq.s32.totalorder %s116, 0
      %s119 = sadd.s32 %s118, 1
      %s120 = scalar_select %p117, %s118, %s119
      %p123 = pneg %p117
      %p124 = scmp.eq.s32.totalorder %s19, 3
      %p125 = por %p123, %p124
      %p126 = scmp.ne.s32.totalorder %s118, %s121
      %p127 = scmp.eq.s32.totalorder %s19, 0
      %p128 = por %p126, %p127
      %p129 = scmp.ne.s32.totalorder %s118, %s121
      %p130 = scmp.eq.s32.totalorder %s24, 3
      %p131 = por %p129, %p130
      %p132 = scmp.ne.s32.totalorder %s121, %s122
      %p133 = scmp.eq.s32.totalorder %s24, 0
      %p134 = por %p132, %p133
      %p135 = scmp.ne.s32.totalorder %s121, %s122
      %p136 = scmp.eq.s32.totalorder %s25, 3
      %p137 = por %p135, %p136
      %p139 = scmp.ne.s32.totalorder %s122, %s138
      %p140 = scmp.eq.s32.totalorder %s25, 0
      %p141 = por %p139, %p140
      %s142 = ssub.s32 %s19, %s26
      %p143 = scmp.eq.s32.totalorder %s142, 0
      %s145 = sadd.s32 %s144, 1
      %s146 = scalar_select %p143, %s144, %s145
      %p149 = pneg %p143
      %p150 = scmp.eq.s32.totalorder %s19, 3
      %p151 = por %p149, %p150
      %p152 = scmp.ne.s32.totalorder %s144, %s147
      %p153 = scmp.eq.s32.totalorder %s19, 0
      %p154 = por %p152, %p153
      %p155 = scmp.ne.s32.totalorder %s144, %s147
      %p156 = scmp.eq.s32.totalorder %s24, 3
      %p157 = por %p155, %p156
      %p158 = scmp.ne.s32.totalorder %s147, %s148
      %p159 = scmp.eq.s32.totalorder %s24, 0
      %p160 = por %p158, %p159
      %p161 = scmp.ne.s32.totalorder %s147, %s148
      %p162 = scmp.eq.s32.totalorder %s25, 3
      %p163 = por %p161, %p162
      %p165 = scmp.ne.s32.totalorder %s148, %s164
      %p166 = scmp.eq.s32.totalorder %s25, 0
      %p167 = por %p165, %p166
      %p168 = scmp.le.s32.totalorder 1, %s19
      %p169 = scmp.lt.s32.totalorder %s19, 5
      %p170 = pnand %p168, %p169
      %p171 = pneg %p170
      // Predicated region
      $region9: #{_run_kernel.1} parent=5 // pred_check
        _
      $region10: #{_run_kernel.1} parent=5 // pred_check_branch
        %173 = sbr.rel (%p170) target = $region12
      $region11: #{_run_kernel.1} parent=5 // pred_region
        %s174 = ssub.s32 %s19, 1
        // Predicated region
        $region13: #{_run_kernel.1} parent=11 // pred_check
          %p175 = pneg %p66
        $region14: #{_run_kernel.1} parent=11 // pred_check_branch
          %177 = sbr.rel (%p175) target = $region16
        $region15: #{_run_kernel.1} parent=11 // pred_region
          %s179 = ssub.s32 256, 256
          %180 = vsyncadd [#allocation7], %s179
          %s181 = sshll.u32 [#allocation6], 4
          %s182 = int_to_ptr.vmem [resolvable:$true] %s181
          %187 = dma.hbm_to_vmem [thread:$0]  %s1, 256, %s182, [#allocation7], 128, 128, 8
        $region16: #{_run_kernel.1} parent=11 // pred_fallthru
          _
        // Predicated region
        $region17: #{_run_kernel.1} parent=11 // pred_check
          %p188 = pneg %p87
        $region18: #{_run_kernel.1} parent=11 // pred_check_branch
          %190 = sbr.rel (%p188) target = $region20
        $region19: #{_run_kernel.1} parent=11 // pred_region
          _
        $region20: #{_run_kernel.1} parent=11 // pred_fallthru
          _
        // Predicated region
        $region21: #{_run_kernel.1} parent=11 // pred_check
          %p191 = pneg %p108
        $region22: #{_run_kernel.1} parent=11 // pred_check_branch
          %193 = sbr.rel (%p191) target = $region24
        $region23: #{_run_kernel.1} parent=11 // pred_region
          %s195 = ssub.s32 10752, 10752
          %196 = vsyncadd [#allocation7], %s195
          %s197 = sshll.u32 [#allocation8], 4
          %s198 = int_to_ptr.vmem [resolvable:$true] %s197
          %203 = dma.hbm_to_vmem [thread:$0]  %s3, 10752, %s198, [#allocation7], 256, 256, 16
        $region24: #{_run_kernel.1} parent=11 // pred_fallthru
          _
      $region12: #{_run_kernel.1} parent=5 // pred_fallthru
        _
      %p204 = scmp.lt.s32.totalorder %s19, 4
      // Predicated region
      $region25: #{_run_kernel.1} parent=5 // pred_check
        %p205 = pneg %p204
      $region26: #{_run_kernel.1} parent=5 // pred_check_branch
        %207 = sbr.rel (%p205) target = $region28
      $region27: #{_run_kernel.1} parent=5 // pred_region
        // Predicated region
        $region29: #{_run_kernel.1} parent=27 // pred_check
          %p208 = pneg %p39
        $region30: #{_run_kernel.1} parent=27 // pred_check_branch
          %210 = sbr.rel (%p208) target = $region32
        $region31: #{_run_kernel.1} parent=27 // pred_region
          %s211 = sand.u32 %s29, 1
          %s212 = scalar_lea.sflag [#allocation4], %s211
          %s213 = sand.u32 %s29, 1
          %s214 = smul.addr %s213, 2
          %s215 = scalar_lea.vmem [#allocation3], %s214
          %s217 = ssub.s32 32, 32
          %218 = vsyncadd %s212, %s217
          %s219 = smul.addr %s19, 32
          %s220 = scalar_lea.hbm %s0, %s219
          %s222 = sshll.u32 %s215, 4
          %s223 = int_to_ptr.vmem [resolvable:$true] %s222
          %225 = dma.hbm_to_vmem [thread:$0]  %s220, 32, %s223, %s212
        $region32: #{_run_kernel.1} parent=27 // pred_fallthru
          _
      $region28: #{_run_kernel.1} parent=5 // pred_fallthru
        _
      %p226 = scmp.le.s32.totalorder 1, %s19
      %p227 = scmp.lt.s32.totalorder %s19, 5
      %p228 = pnand %p226, %p227
      %p229 = pneg %p228
      // Predicated region
      $region33: #{_run_kernel.1} parent=5 // pred_check
        _
      $region34: #{_run_kernel.1} parent=5 // pred_check_branch
        %231 = sbr.rel (%p228) target = $region36
      $region35: #{_run_kernel.1} parent=5 // pred_region
        %s232 = ssub.s32 %s19, 1
        %s233 = sand.u32 %s32, 1
        %s234 = scalar_lea.sflag [#allocation4], %s233
        %s235 = sand.u32 %s32, 1
        %s236 = smul.addr %s235, 2
        %s237 = scalar_lea.vmem [#allocation3], %s236
        // Predicated region
        $region37: #{_run_kernel.1} parent=35 // pred_check
          %p238 = pneg %p45
        $region38: #{_run_kernel.1} parent=35 // pred_check_branch
          %240 = sbr.rel (%p238) target = $region40
        $region39: #{_run_kernel.1} parent=35 // pred_region
          %241 = dma.done %s234, 32
        $region40: #{_run_kernel.1} parent=35 // pred_fallthru
          _
        // Predicated region
        $region41: #{_run_kernel.1} parent=35 // pred_check
          %p242 = pneg %p66
        $region42: #{_run_kernel.1} parent=35 // pred_check_branch
          %244 = sbr.rel (%p242) target = $region44
        $region43: #{_run_kernel.1} parent=35 // pred_region
          %245 = dma.done [#allocation7], 256
        $region44: #{_run_kernel.1} parent=35 // pred_fallthru
          _
        // Predicated region
        $region45: #{_run_kernel.1} parent=35 // pred_check
          %p246 = pneg %p108
        $region46: #{_run_kernel.1} parent=35 // pred_check_branch
          %248 = sbr.rel (%p246) target = $region48
        $region47: #{_run_kernel.1} parent=35 // pred_region
          %249 = dma.done [#allocation7], 10752
        $region48: #{_run_kernel.1} parent=35 // pred_fallthru
          _
        %s250 = sand.u32 %s32, 1
        %s251 = scalar_lea.sflag [#allocation4], %s250
        %s252 = sand.u32 %s32, 1
        %s253 = smul.addr %s252, 2
        %s254 = scalar_lea.vmem [#allocation3], %s253
        %p255 = pneg %p45
        %p256 = pneg %p42
        %p257 = pneg %p66
        %p258 = pneg %p63
        %p259 = pneg %p87
        %p260 = pneg %p84
        %p261 = pneg %p108
        %p262 = pneg %p105
        %p263 = pneg %p134
        %p264 = pneg %p131
        %s265 = sand.u32 %s121, 1
        %s266 = scalar_lea.sflag [#allocation5], %s265
        %s267 = sand.u32 %s121, 1
        %s268 = smul.addr %s267, 2
        %s269 = scalar_lea.vmem [#allocation9], %s268
        %p270 = pneg %p160
        %p271 = pneg %p157
        %p272 = scmp.lt.s32.totalorder %s24, 3
        %s273 = scalar_select %p272, %s24, 3
        %s274 = smul.addr %s273, 2
        %s275 = smul.addr %s274, 8
        %s276 = scalar_lea.vmem %s5, %s275
        %p277 = scmp.lt.s32.totalorder %s24, 3
        %s278 = scalar_select %p277, %s24, 3
        %s279 = smul.addr %s278, 2
        %s280 = smul.addr %s279, 8
        %s281 = scalar_lea.vmem %s5, %s280
        %p282 = scmp.eq.s32.totalorder %s24, 0
        // Predicated region
        $region49: #{_run_kernel.1} parent=35 // pred_check
          %p283 = pneg %p282
        $region50: #{_run_kernel.1} parent=35 // pred_check_branch
          %285 = sbr.rel (%p283) target = $region52
        $region51: #{_run_kernel.1} parent=35 // pred_region
          %v286 = vld [vmem:[%s2] sm:$0x3]
          %287 = vst [vmem:[#allocation2] sm:$0x3] %v286
        $region52: #{_run_kernel.1} parent=35 // pred_fallthru
          _
        %v288 = vld [vmem:[%s237] sm:$0x3]
        %v289 = vld [vmem:[#allocation6] sm:$0xff]
        %v290 = vld [vmem:[#allocation6 + $0x8] sm:$0xff]
        %v291 = vld [vmem:[#allocation2] sm:$0x3]
        %v292 = vld [vmem:[#allocation8 + $0x150] sm:$0xff]
        %v293 = vld [vmem:[#allocation8 + $0x160] sm:$0xff]
        %v294 = vld [vmem:[#allocation8 + $0x170] sm:$0xff]
        %v295 = vld [vmem:[#allocation8 + $0x180] sm:$0xff]
        %v296 = vld [vmem:[#allocation8 + $0x190] sm:$0xff]
        %v297 = vld [vmem:[#allocation8 + $0x1a0] sm:$0xff]
        %v298 = vld [vmem:[#allocation8 + $0x1b0] sm:$0xff]
        %v299 = vld [vmem:[#allocation8 + $0x1c0] sm:$0xff]
        %vm300 = vcmask 523264
        %v302 = vsel %vm300, %v291, 0
        %304 = vmatprep.subr.mxu0 0.0
        %305 = vmatpush1.msra.mxu0 %v292
        %306 = vmatprep.subr.mxu0 0.0
        %307 = vmatpush1.msra.mxu0 %v293
        %308 = vmatprep.subr.mxu0 0.0
        %309 = vmatpush1.msra.mxu0 %v294
        %310 = vmatprep.subr.mxu0 0.0
        %311 = vmatpush1.msra.mxu0 %v295
        %312 = vmatprep.subr.mxu0 0.0
        %313 = vmatpush1.msra.mxu0 %v296
        %314 = vmatprep.subr.mxu0 0.0
        %315 = vmatpush1.msra.mxu0 %v297
        %316 = vmatprep.subr.mxu0 0.0
        %317 = vmatpush1.msra.mxu0 %v298
        %318 = vmatprep.subr.mxu0 0.0
        %319 = vmatpush1.msra.mxu0 %v299
        %320 = vmatprep.subr.mxu0 0.0
        %321 = vmatpush1.msra.mxu0 0.0
        %322 = vmatprep.subr.mxu0 0.0
        %323 = vmatpush1.msra.mxu0 0.0
        %324 = vmatprep.subr.mxu0 0.0
        %325 = vmatpush1.msra.mxu0 0.0
        %326 = vmatprep.subr.mxu0 0.0
        %327 = vmatpush1.msra.mxu0 0.0
        %328 = vmatprep.subr.mxu0 0.0
        %329 = vmatpush1.msra.mxu0 0.0
        %330 = vmatprep.subr.mxu0 0.0
        %331 = vmatpush1.msra.mxu0 0.0
        %332 = vmatprep.subr.mxu0 0.0
        %333 = vmatpush1.msra.mxu0 0.0
        %334 = vmatprep.subr.mxu0 0.0
        %335 = vmatpush1.msra.mxu0 0.0
        %336 = vmatprep.subr.mxu0 0.0
        %337 = vmatpush1.msra.mxu0 0.0
        %338 = vmatprep.subr.mxu0 0.0
        %339 = vmatpush1.msra.mxu0 0.0
        %340 = vmatprep.subr.mxu0 0.0
        %341 = vmatpush1.msra.mxu0 0.0
        %342 = vmatprep.subr.mxu0 0.0
        %343 = vmatpush1.msra.mxu0 0.0
        %344 = vmatprep.subr.mxu0 0.0
        %345 = vmatpush1.msra.mxu0 0.0
        %346 = vmatprep.subr.mxu0 0.0
        %347 = vmatpush1.msra.mxu0 0.0
        %348 = vmatprep.subr.mxu0 0.0
        %349 = vmatpush1.msra.mxu0 0.0
        %350 = vmatprep.subr.mxu0 0.0
        %351 = vmatpush1.msra.mxu0 0.0
        %352 = vmatprep.subr.mxu0 0.0
        %353 = vmatpush1.msra.mxu0 0.0
        %354 = vmatprep.subr.mxu0 0.0
        %355 = vmatpush1.msra.mxu0 0.0
        %356 = vmatprep.subr.mxu0 0.0
        %357 = vmatpush1.msra.mxu0 0.0
        %358 = vmatprep.subr.mxu0 0.0
        %359 = vmatpush1.msra.mxu0 0.0
        %360 = vmatprep.subr.mxu0 0.0
        %361 = vmatpush1.msra.mxu0 0.0
        %362 = vmatprep.subr.mxu0 0.0
        %363 = vmatpush1.msra.mxu0 0.0
        %364 = vmatprep.subr.mxu0 0.0
        %365 = vmatpush1.msra.mxu0 0.0
        %366 = vmatprep.subr.mxu0 0.0
        %367 = vmatpush1.msra.mxu0 0.0
        %368 = vmatprep.mubr.f32.mxu0 0.0
        %369 = vmatmul.mubr.f32.gmra.mrb[0].mxu0 %v302
        %v370 = vpop.f32.mrb[0].mxu0
        %v371 = vadd.f32 0.0, %v370
        %v372 = vpop.f32.mrb[0].mxu0
        %373 = vdwg.mxu0
        %v374 = vld [vmem:[#allocation8 + $0x1d0] sm:$0xff]
        %v375 = vld [vmem:[#allocation8 + $0x1e0] sm:$0xff]
        %v376 = vld [vmem:[#allocation8 + $0x1f0] sm:$0xff]
        %v377 = vld [vmem:[#allocation8 + $0x200] sm:$0xff]
        %v378 = vld [vmem:[#allocation8 + $0x210] ss:$0 sm:$0xff]
        %vm379 = vcmask 261120
        %v381 = vsel %vm379, %v289, 0
        %v384 = vsel %vm379, %v290, 0
        %386 = vmatprep.subr.mxu0 0.0
        %387 = vmatpush1.msra.mxu0 %v374
        %388 = vmatprep.subr.mxu0 0.0
        %389 = vmatpush1.msra.mxu0 %v375
        %390 = vmatprep.subr.mxu0 0.0
        %391 = vmatpush1.msra.mxu0 %v376
        %392 = vmatprep.subr.mxu0 0.0
        %393 = vmatpush1.msra.mxu0 %v377
        %394 = vmatprep.subr.mxu0 0.0
        %395 = vmatpush1.msra.mxu0 0.0
        %396 = vmatprep.subr.mxu0 0.0
        %397 = vmatpush1.msra.mxu0 0.0
        %398 = vmatprep.subr.mxu0 0.0
        %399 = vmatpush1.msra.mxu0 0.0
        %400 = vmatprep.subr.mxu0 0.0
        %401 = vmatpush1.msra.mxu0 0.0
        %402 = vmatprep.subr.mxu0 0.0
        %403 = vmatpush1.msra.mxu0 0.0
        %404 = vmatprep.subr.mxu0 0.0
        %405 = vmatpush1.msra.mxu0 0.0
        %406 = vmatprep.subr.mxu0 0.0
        %407 = vmatpush1.msra.mxu0 0.0
        %408 = vmatprep.subr.mxu0 0.0
        %409 = vmatpush1.msra.mxu0 0.0
        %410 = vmatprep.subr.mxu0 0.0
        %411 = vmatpush1.msra.mxu0 0.0
        %412 = vmatprep.subr.mxu0 0.0
        %413 = vmatpush1.msra.mxu0 0.0
        %414 = vmatprep.subr.mxu0 0.0
        %415 = vmatpush1.msra.mxu0 0.0
        %416 = vmatprep.subr.mxu0 0.0
        %417 = vmatpush1.msra.mxu0 0.0
        %418 = vmatprep.subr.mxu0 0.0
        %419 = vmatpush1.msra.mxu0 0.0
        %420 = vmatprep.subr.mxu0 0.0
        %421 = vmatpush1.msra.mxu0 0.0
        %422 = vmatprep.subr.mxu0 0.0
        %423 = vmatpush1.msra.mxu0 0.0
        %424 = vmatprep.subr.mxu0 0.0
        %425 = vmatpush1.msra.mxu0 0.0
        %426 = vmatprep.subr.mxu0 0.0
        %427 = vmatpush1.msra.mxu0 0.0
        %428 = vmatprep.subr.mxu0 0.0
        %429 = vmatpush1.msra.mxu0 0.0
        %430 = vmatprep.subr.mxu0 0.0
        %431 = vmatpush1.msra.mxu0 0.0
        %432 = vmatprep.subr.mxu0 0.0
        %433 = vmatpush1.msra.mxu0 0.0
        %434 = vmatprep.subr.mxu0 0.0
        %435 = vmatpush1.msra.mxu0 0.0
        %436 = vmatprep.subr.mxu0 0.0
        %437 = vmatpush1.msra.mxu0 0.0
        %438 = vmatprep.subr.mxu0 0.0
        %439 = vmatpush1.msra.mxu0 0.0
        %440 = vmatprep.subr.mxu0 0.0
        %441 = vmatpush1.msra.mxu0 0.0
        %442 = vmatprep.subr.mxu0 0.0
        %443 = vmatpush1.msra.mxu0 0.0
        %444 = vmatprep.subr.mxu0 0.0
        %445 = vmatpush1.msra.mxu0 0.0
        %446 = vmatprep.subr.mxu0 0.0
        %447 = vmatpush1.msra.mxu0 0.0
        %448 = vmatprep.subr.mxu0 0.0
        %449 = vmatpush1.msra.mxu0 0.0
        %450 = vmatprep.mubr.f32.mxu0 0.0
        %451 = vmatmul.mubr.f32.gmra.mrb[0].mxu0 %v381
        %v452 = vpop.f32.mrb[0].mxu0
        %v453 = vadd.f32 %v378, %v452
        %v454 = vpop.f32.mrb[0].mxu0
        %455 = vmatprep.mubr.f32.mxu0 0.0
        %456 = vmatmul.mubr.f32.gmra.mrb[0].mxu0 %v384
        %v457 = vpop.f32.mrb[0].mxu0
        %v458 = vadd.f32 %v378, %v457
        %v459 = vpop.f32.mrb[0].mxu0
        %460 = vdwg.mxu0
        %v463 = vunpack.c.l.s4 1966171168
        %v464 = vunpack.c.0.s8 %v463
        %v465 = vlaneseq
        %v466 = vshrl.u32 %v465, 7
        %v467 = vsub.s32 %v464, %v466
        %v468 = vrot.slane %v371, %v467
        %v469 = vcombine.high %v468, %v468
        %v471 = vunpack.c.l.s4 1966171168
        %v472 = vunpack.c.0.s8 %v471
        %v473 = vlaneseq
        %v474 = vshrl.u32 %v473, 7
        %v475 = vsub.s32 %v472, %v474
        %v476 = vrot.slane %v468, %v475
        %v478 = vunpack.c.l.s4 1966171168
        %v479 = vunpack.c.0.s8 %v478
        %v480 = vlaneseq
        %v481 = vshrl.u32 %v480, 7
        %v482 = vsub.s32 %v479, %v481
        %v483 = vrot.slane %v469, %v482
        %v484 = vlaneseq
        %v485 = vshrl.u32 %v484, 7
        %v486 = vsub.s32 0, %v485
        %v487 = vrot.slane %v476, %v486
        %v488 = vlaneseq
        %v489 = vshrl.u32 %v488, 7
        %v490 = vsub.s32 0, %v489
        %v491 = vrot.slane %v483, %v490
        %v494 = vadd.f32 %v487, %v453
        %v495 = vadd.f32 %v491, %v458
        %v496 = vtanh.pop %v494
        %v497 = vtanh.pop %v495
        %v498 = vld [vmem:[#allocation8 + $0x220] sm:$0xff]
        %v499 = vld [vmem:[#allocation8 + $0x230] sm:$0xff]
        %v500 = vld [vmem:[#allocation8 + $0x240] sm:$0xff]
        %v501 = vld [vmem:[#allocation8 + $0x250] sm:$0xff]
        %v502 = vld [vmem:[#allocation8 + $0x260] sm:$0xff]
        %v503 = vld [vmem:[#allocation8 + $0x270] sm:$0xff]
        %v504 = vld [vmem:[#allocation8 + $0x280] sm:$0xff]
        %v505 = vld [vmem:[#allocation8 + $0x290] sm:$0xff]
        %v507 = vsel %vm300, %v496, 0
        %v510 = vsel %vm300, %v497, 0
        %512 = vmatprep.subr.mxu0 0.0
        %513 = vmatpush1.msra.mxu0 %v498
        %514 = vmatprep.subr.mxu0 0.0
        %515 = vmatpush1.msra.mxu0 %v499
        %516 = vmatprep.subr.mxu0 0.0
        %517 = vmatpush1.msra.mxu0 %v500
        %518 = vmatprep.subr.mxu0 0.0
        %519 = vmatpush1.msra.mxu0 %v501
        %520 = vmatprep.subr.mxu0 0.0
        %521 = vmatpush1.msra.mxu0 %v502
        %522 = vmatprep.subr.mxu0 0.0
        %523 = vmatpush1.msra.mxu0 %v503
        %524 = vmatprep.subr.mxu0 0.0
        %525 = vmatpush1.msra.mxu0 %v504
        %526 = vmatprep.subr.mxu0 0.0
        %527 = vmatpush1.msra.mxu0 %v505
        %528 = vmatprep.subr.mxu0 0.0
        %529 = vmatpush1.msra.mxu0 0.0
        %530 = vmatprep.subr.mxu0 0.0
        %531 = vmatpush1.msra.mxu0 0.0
        %532 = vmatprep.subr.mxu0 0.0
        %533 = vmatpush1.msra.mxu0 0.0
        %534 = vmatprep.subr.mxu0 0.0
        %535 = vmatpush1.msra.mxu0 0.0
        %536 = vmatprep.subr.mxu0 0.0
        %537 = vmatpush1.msra.mxu0 0.0
        %538 = vmatprep.subr.mxu0 0.0
        %539 = vmatpush1.msra.mxu0 0.0
        %540 = vmatprep.subr.mxu0 0.0
        %541 = vmatpush1.msra.mxu0 0.0
        %542 = vmatprep.subr.mxu0 0.0
        %543 = vmatpush1.msra.mxu0 0.0
        %544 = vmatprep.subr.mxu0 0.0
        %545 = vmatpush1.msra.mxu0 0.0
        %546 = vmatprep.subr.mxu0 0.0
        %547 = vmatpush1.msra.mxu0 0.0
        %548 = vmatprep.subr.mxu0 0.0
        %549 = vmatpush1.msra.mxu0 0.0
        %550 = vmatprep.subr.mxu0 0.0
        %551 = vmatpush1.msra.mxu0 0.0
        %552 = vmatprep.subr.mxu0 0.0
        %553 = vmatpush1.msra.mxu0 0.0
        %554 = vmatprep.subr.mxu0 0.0
        %555 = vmatpush1.msra.mxu0 0.0
        %556 = vmatprep.subr.mxu0 0.0
        %557 = vmatpush1.msra.mxu0 0.0
        %558 = vmatprep.subr.mxu0 0.0
        %559 = vmatpush1.msra.mxu0 0.0
        %560 = vmatprep.subr.mxu0 0.0
        %561 = vmatpush1.msra.mxu0 0.0
        %562 = vmatprep.subr.mxu0 0.0
        %563 = vmatpush1.msra.mxu0 0.0
        %564 = vmatprep.subr.mxu0 0.0
        %565 = vmatpush1.msra.mxu0 0.0
        %566 = vmatprep.subr.mxu0 0.0
        %567 = vmatpush1.msra.mxu0 0.0
        %568 = vmatprep.subr.mxu0 0.0
        %569 = vmatpush1.msra.mxu0 0.0
        %570 = vmatprep.subr.mxu0 0.0
        %571 = vmatpush1.msra.mxu0 0.0
        %572 = vmatprep.subr.mxu0 0.0
        %573 = vmatpush1.msra.mxu0 0.0
        %574 = vmatprep.subr.mxu0 0.0
        %575 = vmatpush1.msra.mxu0 0.0
        %576 = vmatprep.mubr.f32.mxu0 0.0
        %577 = vmatmul.mubr.f32.gmra.mrb[0].mxu0 %v507
        %v578 = vpop.f32.mrb[0].mxu0
        %v579 = vadd.f32 0.0, %v578
        %v580 = vpop.f32.mrb[0].mxu0
        %581 = vmatprep.mubr.f32.mxu0 0.0
        %582 = vmatmul.mubr.f32.gmra.mrb[0].mxu0 %v510
        %v583 = vpop.f32.mrb[0].mxu0
        %v584 = vadd.f32 0.0, %v583
        %v585 = vpop.f32.mrb[0].mxu0
        %586 = vdwg.mxu0
        %v587 = vrot.slane %v579, 4
        %v588 = vmax.f32 %v579, %v587
        %v589 = vrot.slane %v588, 2
        %v590 = vmax.f32 %v588, %v589
        %v591 = vrot.slane %v590, 1
        %v592 = vmax.f32 %v590, %v591
        %v593 = vrot.slane %v584, 4
        %v594 = vmax.f32 %v584, %v593
        %v595 = vrot.slane %v594, 2
        %v596 = vmax.f32 %v594, %v595
        %v597 = vrot.slane %v596, 1
        %v598 = vmax.f32 %v596, %v597
        %v599 = vsub.f32 %v579, %v592
        %v600 = vsub.f32 %v584, %v598
        %v601 = vmul.f32 %v599, 1.442695
        %v602 = vpow.pop %v601
        %v603 = vmul.f32 %v600, 1.442695
        %v604 = vpow.pop %v603
        %v605 = vrot.slane %v602, 4
        %v606 = vadd.f32 %v602, %v605
        %v607 = vrot.slane %v606, 2
        %v608 = vadd.f32 %v606, %v607
        %v609 = vrot.slane %v608, 1
        %v610 = vadd.f32 %v608, %v609
        %v611 = vrot.slane %v604, 4
        %v612 = vadd.f32 %v604, %v611
        %v613 = vrot.slane %v612, 2
        %v614 = vadd.f32 %v612, %v613
        %v615 = vrot.slane %v614, 1
        %v616 = vadd.f32 %v614, %v615
        %v617 = vrcp.pop %v610
        %v618 = vrcp.pop %v616
        %v619 = vmul.f32 %v602, %v617
        %v620 = vmul.f32 %v604, %v618
        %vm621 = vcmask 15360
        %622 = vst.msk [vmem:[%s281] sm:$0xff] %vm621, %v619
        %623 = vst.msk [vmem:[%s281 + $0x8] sm:$0xff] %vm621, %v620
        %v624 = vld [vmem:[#allocation8] sm:$0xff]
        %v625 = vld [vmem:[#allocation8 + $0x8] sm:$0xff]
        %v626 = vld [vmem:[#allocation8 + $0x10] sm:$0xff]
        %v627 = vld [vmem:[#allocation8 + $0x18] sm:$0xff]
        %v628 = vld [vmem:[#allocation8 + $0x20] sm:$0xff]
        %v629 = vld [vmem:[#allocation8 + $0x28] sm:$0xff]
        %v630 = vld [vmem:[#allocation8 + $0x30] sm:$0xff]
        %v631 = vld [vmem:[#allocation8 + $0x38] sm:$0xff]
        %v632 = vld [vmem:[#allocation8 + $0xc0] sm:$0xff]
        %v633 = vld [vmem:[#allocation8 + $0xc8] sm:$0xff]
        %v634 = vld [vmem:[#allocation8 + $0xd0] sm:$0xff]
        %v635 = vld [vmem:[#allocation8 + $0xd8] sm:$0xff]
        %v636 = vld [vmem:[#allocation8 + $0xe0] sm:$0xff]
        %v637 = vld [vmem:[#allocation8 + $0xe8] sm:$0xff]
        %v638 = vld [vmem:[#allocation8 + $0xf0] sm:$0xff]
        %v639 = vld [vmem:[#allocation8 + $0xf8] sm:$0xff]
        %v640 = vld [vmem:[#allocation8 + $0x100] sm:$0xff]
        %v641 = vld [vmem:[#allocation8 + $0x108] sm:$0xff]
        %v642 = vld [vmem:[#allocation8 + $0x110] sm:$0xff]
        %v643 = vld [vmem:[#allocation8 + $0x118] sm:$0xff]
        %v644 = vld [vmem:[#allocation8 + $0x120] sm:$0xff]
        %v645 = vld [vmem:[#allocation8 + $0x128] sm:$0xff]
        %v646 = vld [vmem:[#allocation8 + $0x130] sm:$0xff]
        %v647 = vld [vmem:[#allocation8 + $0x138] sm:$0xff]
        %648 = vmatprep.subr.mxu0 %v633
        %649 = vmatpush1.msra.mxu0 %v632
        %650 = vmatprep.subr.mxu0 %v635
        %651 = vmatpush1.msra.mxu0 %v634
        %652 = vmatprep.subr.mxu0 %v637
        %653 = vmatpush1.msra.mxu0 %v636
        %654 = vmatprep.subr.mxu0 %v639
        %655 = vmatpush1.msra.mxu0 %v638
        %656 = vmatprep.subr.mxu0 %v641
        %657 = vmatpush1.msra.mxu0 %v640
        %658 = vmatprep.subr.mxu0 %v643
        %659 = vmatpush1.msra.mxu0 %v642
        %660 = vmatprep.subr.mxu0 %v645
        %661 = vmatpush1.msra.mxu0 %v644
        %662 = vmatprep.subr.mxu0 %v647
        %663 = vmatpush1.msra.mxu0 %v646
        %664 = vmatprep.subr.mxu0 0.0
        %665 = vmatpush1.msra.mxu0 0.0
        %666 = vmatprep.subr.mxu0 0.0
        %667 = vmatpush1.msra.mxu0 0.0
        %668 = vmatprep.subr.mxu0 0.0
        %669 = vmatpush1.msra.mxu0 0.0
        %670 = vmatprep.subr.mxu0 0.0
        %671 = vmatpush1.msra.mxu0 0.0
        %672 = vmatprep.subr.mxu0 0.0
        %673 = vmatpush1.msra.mxu0 0.0
        %674 = vmatprep.subr.mxu0 0.0
        %675 = vmatpush1.msra.mxu0 0.0
        %676 = vmatprep.subr.mxu0 0.0
        %677 = vmatpush1.msra.mxu0 0.0
        %678 = vmatprep.subr.mxu0 0.0
        %679 = vmatpush1.msra.mxu0 0.0
        %680 = vmatprep.subr.mxu0 0.0
        %681 = vmatpush1.msra.mxu0 0.0
        %682 = vmatprep.subr.mxu0 0.0
        %683 = vmatpush1.msra.mxu0 0.0
        %684 = vmatprep.subr.mxu0 0.0
        %685 = vmatpush1.msra.mxu0 0.0
        %686 = vmatprep.subr.mxu0 0.0
        %687 = vmatpush1.msra.mxu0 0.0
        %688 = vmatprep.subr.mxu0 0.0
        %689 = vmatpush1.msra.mxu0 0.0
        %690 = vmatprep.subr.mxu0 0.0
        %691 = vmatpush1.msra.mxu0 0.0
        %692 = vmatprep.subr.mxu0 0.0
        %693 = vmatpush1.msra.mxu0 0.0
        %694 = vmatprep.subr.mxu0 0.0
        %695 = vmatpush1.msra.mxu0 0.0
        %696 = vmatprep.subr.mxu0 0.0
        %697 = vmatpush1.msra.mxu0 0.0
        %698 = vmatprep.subr.mxu0 0.0
        %699 = vmatpush1.msra.mxu0 0.0
        %700 = vmatprep.subr.mxu0 0.0
        %701 = vmatpush1.msra.mxu0 0.0
        %702 = vmatprep.subr.mxu0 0.0
        %703 = vmatpush1.msra.mxu0 0.0
        %704 = vmatprep.subr.mxu0 0.0
        %705 = vmatpush1.msra.mxu0 0.0
        %706 = vmatprep.subr.mxu0 0.0
        %707 = vmatpush1.msra.mxu0 0.0
        %708 = vmatprep.subr.mxu0 0.0
        %709 = vmatpush1.msra.mxu0 0.0
        %710 = vmatprep.subr.mxu0 0.0
        %711 = vmatpush1.msra.mxu0 0.0
        %712 = vmatprep.mubr.f32.mxu0 0.0
        %713 = vmatmul.mubr.f32.gmra.mrb[0].mxu0 %v302
        %v714 = vpop.f32.mrb[0].mxu0
        %v715 = vadd.f32 0.0, %v714
        %v716 = vpop.f32.mrb[0].mxu0
        %v717 = vadd.f32 0.0, %v716
        %718 = vdwg.mxu0
        %v720 = vsel %vm379, %v288, 0
        %722 = vmatprep.subr.mxu0 %v625
        %723 = vmatpush1.msra.mxu0 %v624
        %724 = vmatprep.subr.mxu0 %v627
        %725 = vmatpush1.msra.mxu0 %v626
        %726 = vmatprep.subr.mxu0 %v629
        %727 = vmatpush1.msra.mxu0 %v628
        %728 = vmatprep.subr.mxu0 %v631
        %729 = vmatpush1.msra.mxu0 %v630
        %730 = vmatprep.subr.mxu0 0.0
        %731 = vmatpush1.msra.mxu0 0.0
        %732 = vmatprep.subr.mxu0 0.0
        %733 = vmatpush1.msra.mxu0 0.0
        %734 = vmatprep.subr.mxu0 0.0
        %735 = vmatpush1.msra.mxu0 0.0
        %736 = vmatprep.subr.mxu0 0.0
        %737 = vmatpush1.msra.mxu0 0.0
        %738 = vmatprep.subr.mxu0 0.0
        %739 = vmatpush1.msra.mxu0 0.0
        %740 = vmatprep.subr.mxu0 0.0
        %741 = vmatpush1.msra.mxu0 0.0
        %742 = vmatprep.subr.mxu0 0.0
        %743 = vmatpush1.msra.mxu0 0.0
        %744 = vmatprep.subr.mxu0 0.0
        %745 = vmatpush1.msra.mxu0 0.0
        %746 = vmatprep.subr.mxu0 0.0
        %747 = vmatpush1.msra.mxu0 0.0
        %748 = vmatprep.subr.mxu0 0.0
        %749 = vmatpush1.msra.mxu0 0.0
        %750 = vmatprep.subr.mxu0 0.0
        %751 = vmatpush1.msra.mxu0 0.0
        %752 = vmatprep.subr.mxu0 0.0
        %753 = vmatpush1.msra.mxu0 0.0
        %754 = vmatprep.subr.mxu0 0.0
        %755 = vmatpush1.msra.mxu0 0.0
        %756 = vmatprep.subr.mxu0 0.0
        %757 = vmatpush1.msra.mxu0 0.0
        %758 = vmatprep.subr.mxu0 0.0
        %759 = vmatpush1.msra.mxu0 0.0
        %760 = vmatprep.subr.mxu0 0.0
        %761 = vmatpush1.msra.mxu0 0.0
        %762 = vmatprep.subr.mxu0 0.0
        %763 = vmatpush1.msra.mxu0 0.0
        %764 = vmatprep.subr.mxu0 0.0
        %765 = vmatpush1.msra.mxu0 0.0
        %766 = vmatprep.subr.mxu0 0.0
        %767 = vmatpush1.msra.mxu0 0.0
        %768 = vmatprep.subr.mxu0 0.0
        %769 = vmatpush1.msra.mxu0 0.0
        %770 = vmatprep.subr.mxu0 0.0
        %771 = vmatpush1.msra.mxu0 0.0
        %772 = vmatprep.subr.mxu0 0.0
        %773 = vmatpush1.msra.mxu0 0.0
        %774 = vmatprep.subr.mxu0 0.0
        %775 = vmatpush1.msra.mxu0 0.0
        %776 = vmatprep.subr.mxu0 0.0
        %777 = vmatpush1.msra.mxu0 0.0
        %778 = vmatprep.subr.mxu0 0.0
        %779 = vmatpush1.msra.mxu0 0.0
        %780 = vmatprep.subr.mxu0 0.0
        %781 = vmatpush1.msra.mxu0 0.0
        %782 = vmatprep.subr.mxu0 0.0
        %783 = vmatpush1.msra.mxu0 0.0
        %784 = vmatprep.subr.mxu0 0.0
        %785 = vmatpush1.msra.mxu0 0.0
        %786 = vmatprep.mubr.f32.mxu0 0.0
        %787 = vmatmul.mubr.f32.gmra.mrb[0].mxu0 %v720
        %v788 = vpop.f32.mrb[0].mxu0
        %v789 = vadd.f32 %v715, %v788
        %v790 = vpop.f32.mrb[0].mxu0
        %v791 = vadd.f32 %v717, %v790
        %792 = vdwg.mxu0
        %s793 = scalar_lea.vmem [#allocation8], 320
        %v794 = vld [vmem:[%s793] ss:$8 sm:$0x3]
        %v796 = vlaneseq
        %v797 = vshrl.u32 %v796, 7
        %v798 = vsub.s32 0, %v797
        %v799 = vrot.slane %v794, %v798
        %v800 = vlaneseq
        %v801 = vshrl.u32 %v800, 7
        %v802 = vsub.s32 1, %v801
        %v803 = vrot.slane %v794, %v802
        %v806 = vadd.f32 %v789, %v799
        %v807 = vadd.f32 %v791, %v803
        %809 = vset.pattern.permute.xlu0 0
        %810 = vperm.xlu0 %809, %v619
        %v811 = vpop.permute.xlu0 %810
        %814 = vset.pattern.permute.xlu0 0
        %815 = vperm.xlu0 %814, %v620
        %v816 = vpop.permute.xlu0 %815
        %v818 = vmul.f32 %v811, %v289
        %v819 = vmul.f32 %v816, %v290
        %v820 = vsel %vm379, %v818, 0.0
        %v821 = vrot.slane %v820, 4
        %v822 = vadd.f32 %v820, %v821
        %v823 = vrot.slane %v822, 2
        %v824 = vadd.f32 %v822, %v823
        %v825 = vrot.slane %v824, 1
        %v826 = vadd.f32 %v824, %v825
        %v827 = vsel %vm379, %v819, 0.0
        %v828 = vrot.slane %v827, 4
        %v829 = vadd.f32 %v827, %v828
        %v830 = vrot.slane %v829, 2
        %v831 = vadd.f32 %v829, %v830
        %v832 = vrot.slane %v831, 1
        %v833 = vadd.f32 %v831, %v832
        %v834 = vld [vmem:[#allocation8 + $0x40] sm:$0xff]
        %v835 = vld [vmem:[#allocation8 + $0x48] sm:$0xff]
        %v836 = vld [vmem:[#allocation8 + $0x50] sm:$0xff]
        %v837 = vld [vmem:[#allocation8 + $0x58] sm:$0xff]
        %v838 = vld [vmem:[#allocation8 + $0x60] sm:$0xff]
        %v839 = vld [vmem:[#allocation8 + $0x68] sm:$0xff]
        %v840 = vld [vmem:[#allocation8 + $0x70] sm:$0xff]
        %v841 = vld [vmem:[#allocation8 + $0x78] sm:$0xff]
        %vm844 = vcmask 1041409
        %v845 = vsel %vm844, %v833, %v826
        %v846 = vsel %vm379, %v845, 0
        %848 = vmatprep.subr.mxu0 %v835
        %849 = vmatpush1.msra.mxu0 %v834
        %850 = vmatprep.subr.mxu0 %v837
        %851 = vmatpush1.msra.mxu0 %v836
        %852 = vmatprep.subr.mxu0 %v839
        %853 = vmatpush1.msra.mxu0 %v838
        %854 = vmatprep.subr.mxu0 %v841
        %855 = vmatpush1.msra.mxu0 %v840
        %856 = vmatprep.subr.mxu0 0.0
        %857 = vmatpush1.msra.mxu0 0.0
        %858 = vmatprep.subr.mxu0 0.0
        %859 = vmatpush1.msra.mxu0 0.0
        %860 = vmatprep.subr.mxu0 0.0
        %861 = vmatpush1.msra.mxu0 0.0
        %862 = vmatprep.subr.mxu0 0.0
        %863 = vmatpush1.msra.mxu0 0.0
        %864 = vmatprep.subr.mxu0 0.0
        %865 = vmatpush1.msra.mxu0 0.0
        %866 = vmatprep.subr.mxu0 0.0
        %867 = vmatpush1.msra.mxu0 0.0
        %868 = vmatprep.subr.mxu0 0.0
        %869 = vmatpush1.msra.mxu0 0.0
        %870 = vmatprep.subr.mxu0 0.0
        %871 = vmatpush1.msra.mxu0 0.0
        %872 = vmatprep.subr.mxu0 0.0
        %873 = vmatpush1.msra.mxu0 0.0
        %874 = vmatprep.subr.mxu0 0.0
        %875 = vmatpush1.msra.mxu0 0.0
        %876 = vmatprep.subr.mxu0 0.0
        %877 = vmatpush1.msra.mxu0 0.0
        %878 = vmatprep.subr.mxu0 0.0
        %879 = vmatpush1.msra.mxu0 0.0
        %880 = vmatprep.subr.mxu0 0.0
        %881 = vmatpush1.msra.mxu0 0.0
        %882 = vmatprep.subr.mxu0 0.0
        %883 = vmatpush1.msra.mxu0 0.0
        %884 = vmatprep.subr.mxu0 0.0
        %885 = vmatpush1.msra.mxu0 0.0
        %886 = vmatprep.subr.mxu0 0.0
        %887 = vmatpush1.msra.mxu0 0.0
        %888 = vmatprep.subr.mxu0 0.0
        %889 = vmatpush1.msra.mxu0 0.0
        %890 = vmatprep.subr.mxu0 0.0
        %891 = vmatpush1.msra.mxu0 0.0
        %892 = vmatprep.subr.mxu0 0.0
        %893 = vmatpush1.msra.mxu0 0.0
        %894 = vmatprep.subr.mxu0 0.0
        %895 = vmatpush1.msra.mxu0 0.0
        %896 = vmatprep.subr.mxu0 0.0
        %897 = vmatpush1.msra.mxu0 0.0
        %898 = vmatprep.subr.mxu0 0.0
        %899 = vmatpush1.msra.mxu0 0.0
        %900 = vmatprep.subr.mxu0 0.0
        %901 = vmatpush1.msra.mxu0 0.0
        %902 = vmatprep.subr.mxu0 0.0
        %903 = vmatpush1.msra.mxu0 0.0
        %904 = vmatprep.subr.mxu0 0.0
        %905 = vmatpush1.msra.mxu0 0.0
        %906 = vmatprep.subr.mxu0 0.0
        %907 = vmatpush1.msra.mxu0 0.0
        %908 = vmatprep.subr.mxu0 0.0
        %909 = vmatpush1.msra.mxu0 0.0
        %910 = vmatprep.subr.mxu0 0.0
        %911 = vmatpush1.msra.mxu0 0.0
        %912 = vmatprep.mubr.f32.mxu0 0.0
        %913 = vmatmul.mubr.f32.gmra.mrb[0].mxu0 %v846
        %v914 = vpop.f32.mrb[0].mxu0
        %v915 = vadd.f32 0.0, %v914
        %v916 = vpop.f32.mrb[0].mxu0
        %v917 = vadd.f32 0.0, %v916
        %918 = vdwg.mxu0
        %v919 = vadd.f32 %v806, %v915
        %v920 = vadd.f32 %v807, %v917
        %921 = vset.pattern.permute.xlu0 1
        %922 = vperm.xlu0 %921, %v619
        %v923 = vpop.permute.xlu0 %922
        %925 = vset.pattern.permute.xlu0 1
        %926 = vperm.xlu0 %925, %v620
        %v927 = vpop.permute.xlu0 %926
        %v929 = vmul.f32 %v923, %v289
        %v930 = vmul.f32 %v927, %v290
        %v931 = vsel %vm379, %v929, 0.0
        %v932 = vrot.slane %v931, 4
        %v933 = vadd.f32 %v931, %v932
        %v934 = vrot.slane %v933, 2
        %v935 = vadd.f32 %v933, %v934
        %v936 = vrot.slane %v935, 1
        %v937 = vadd.f32 %v935, %v936
        %v938 = vsel %vm379, %v930, 0.0
        %v939 = vrot.slane %v938, 4
        %v940 = vadd.f32 %v938, %v939
        %v941 = vrot.slane %v940, 2
        %v942 = vadd.f32 %v940, %v941
        %v943 = vrot.slane %v942, 1
        %v944 = vadd.f32 %v942, %v943
        %v945 = vld [vmem:[#allocation8 + $0x80] sm:$0xff]
        %v946 = vld [vmem:[#allocation8 + $0x88] sm:$0xff]
        %v947 = vld [vmem:[#allocation8 + $0x90] sm:$0xff]
        %v948 = vld [vmem:[#allocation8 + $0x98] sm:$0xff]
        %v949 = vld [vmem:[#allocation8 + $0xa0] sm:$0xff]
        %v950 = vld [vmem:[#allocation8 + $0xa8] sm:$0xff]
        %v951 = vld [vmem:[#allocation8 + $0xb0] sm:$0xff]
        %v952 = vld [vmem:[#allocation8 + $0xb8] sm:$0xff]
        %v955 = vsel %vm844, %v944, %v937
        %v956 = vsel %vm379, %v955, 0
        %958 = vmatprep.subr.mxu0 %v946
        %959 = vmatpush1.msra.mxu0 %v945
        %960 = vmatprep.subr.mxu0 %v948
        %961 = vmatpush1.msra.mxu0 %v947
        %962 = vmatprep.subr.mxu0 %v950
        %963 = vmatpush1.msra.mxu0 %v949
        %964 = vmatprep.subr.mxu0 %v952
        %965 = vmatpush1.msra.mxu0 %v951
        %966 = vmatprep.subr.mxu0 0.0
        %967 = vmatpush1.msra.mxu0 0.0
        %968 = vmatprep.subr.mxu0 0.0
        %969 = vmatpush1.msra.mxu0 0.0
        %970 = vmatprep.subr.mxu0 0.0
        %971 = vmatpush1.msra.mxu0 0.0
        %972 = vmatprep.subr.mxu0 0.0
        %973 = vmatpush1.msra.mxu0 0.0
        %974 = vmatprep.subr.mxu0 0.0
        %975 = vmatpush1.msra.mxu0 0.0
        %976 = vmatprep.subr.mxu0 0.0
        %977 = vmatpush1.msra.mxu0 0.0
        %978 = vmatprep.subr.mxu0 0.0
        %979 = vmatpush1.msra.mxu0 0.0
        %980 = vmatprep.subr.mxu0 0.0
        %981 = vmatpush1.msra.mxu0 0.0
        %982 = vmatprep.subr.mxu0 0.0
        %983 = vmatpush1.msra.mxu0 0.0
        %984 = vmatprep.subr.mxu0 0.0
        %985 = vmatpush1.msra.mxu0 0.0
        %986 = vmatprep.subr.mxu0 0.0
        %987 = vmatpush1.msra.mxu0 0.0
        %988 = vmatprep.subr.mxu0 0.0
        %989 = vmatpush1.msra.mxu0 0.0
        %990 = vmatprep.subr.mxu0 0.0
        %991 = vmatpush1.msra.mxu0 0.0
        %992 = vmatprep.subr.mxu0 0.0
        %993 = vmatpush1.msra.mxu0 0.0
        %994 = vmatprep.subr.mxu0 0.0
        %995 = vmatpush1.msra.mxu0 0.0
        %996 = vmatprep.subr.mxu0 0.0
        %997 = vmatpush1.msra.mxu0 0.0
        %998 = vmatprep.subr.mxu0 0.0
        %999 = vmatpush1.msra.mxu0 0.0
        %1000 = vmatprep.subr.mxu0 0.0
        %1001 = vmatpush1.msra.mxu0 0.0
        %1002 = vmatprep.subr.mxu0 0.0
        %1003 = vmatpush1.msra.mxu0 0.0
        %1004 = vmatprep.subr.mxu0 0.0
        %1005 = vmatpush1.msra.mxu0 0.0
        %1006 = vmatprep.subr.mxu0 0.0
        %1007 = vmatpush1.msra.mxu0 0.0
        %1008 = vmatprep.subr.mxu0 0.0
        %1009 = vmatpush1.msra.mxu0 0.0
        %1010 = vmatprep.subr.mxu0 0.0
        %1011 = vmatpush1.msra.mxu0 0.0
        %1012 = vmatprep.subr.mxu0 0.0
        %1013 = vmatpush1.msra.mxu0 0.0
        %1014 = vmatprep.subr.mxu0 0.0
        %1015 = vmatpush1.msra.mxu0 0.0
        %1016 = vmatprep.subr.mxu0 0.0
        %1017 = vmatpush1.msra.mxu0 0.0
        %1018 = vmatprep.subr.mxu0 0.0
        %1019 = vmatpush1.msra.mxu0 0.0
        %1020 = vmatprep.subr.mxu0 0.0
        %1021 = vmatpush1.msra.mxu0 0.0
        %1022 = vmatprep.mubr.f32.mxu0 0.0
        %1023 = vmatmul.mubr.f32.gmra.mrb[0].mxu0 %v956
        %v1024 = vpop.f32.mrb[0].mxu0
        %v1025 = vadd.f32 0.0, %v1024
        %v1026 = vpop.f32.mrb[0].mxu0
        %v1027 = vadd.f32 0.0, %v1026
        %1028 = vdwg.mxu0
        %v1029 = vadd.f32 %v919, %v1025
        %v1030 = vadd.f32 %v920, %v1027
        %v1031 = vxor.u32 %v1029, 2147483648
        %v1032 = vxor.u32 %v1030, 2147483648
        %v1033 = vmul.f32 %v1031, 1.442695
        %v1034 = vpow.pop %v1033
        %v1035 = vmul.f32 %v1032, 1.442695
        %v1036 = vpow.pop %v1035
        %v1037 = vadd.f32 %v1034, 1.0
        %v1038 = vadd.f32 %v1036, 1.0
        %v1039 = vrcp.pop %v1037
        %v1040 = vmul.f32 1.0, %v1039
        %v1041 = vrcp.pop %v1038
        %v1042 = vmul.f32 1.0, %v1041
        %v1043 = vtanh.pop %v1030
        %v1044 = vmul.f32 %v1040, %v291
        %v1045 = vmul.f32 %v1040, %v1043
        %1047 = vrot.lane.b32.xlu0 %v1045, 64
        %v1048 = vpop.permute.xlu0 %1047
        %v1050 = vadd.f32 %v1044, %v1048
        %v1051 = vtanh.pop %v1050
        %v1052 = vmul.f32 %v1042, %v1051
        %1054 = vrot.lane.b32.xlu0 %v1052, 64
        %v1055 = vpop.permute.xlu0 %1054
        %vm1057 = vcmask 517120
        %1058 = vst.msk [vmem:[#allocation2] sm:$0x3] %vm1057, %v1055
        %vm1059 = vcmask 1041920
        %1060 = vst.msk [vmem:[#allocation2] sm:$0x3] %vm1059, %v1050
        %v1061 = vld [vmem:[#allocation2] sm:$0x3]
        %1062 = vst [vmem:[%s269] sm:$0x3] %v1061
        %s1063 = sand.u32 %s121, 1
        %s1064 = scalar_lea.sflag [#allocation5], %s1063
        %s1065 = sand.u32 %s121, 1
        %s1066 = smul.addr %s1065, 2
        %s1067 = scalar_lea.vmem [#allocation9], %s1066
        %p1068 = scmp.lt.s32.totalorder %s24, 3
        %s1069 = scalar_select %p1068, %s24, 3
        %s1070 = smul.addr %s1069, 2
        %s1071 = smul.addr %s1070, 8
        %s1072 = scalar_lea.vmem %s5, %s1071
        // Predicated region
        $region53: #{_run_kernel.1} parent=35 // pred_check
          %p1073 = pneg %p131
        $region54: #{_run_kernel.1} parent=35 // pred_check_branch
          %1075 = sbr.rel (%p1073) target = $region56
        $region55: #{_run_kernel.1} parent=35 // pred_region
          %s1077 = ssub.s32 32, 32
          %1078 = vsyncadd %s1064, %s1077
          %s1079 = smul.addr %s24, 32
          %s1080 = scalar_lea.hbm %s4, %s1079
          %s1082 = sshll.u32 %s1067, 4
          %s1083 = int_to_ptr.vmem [resolvable:$true] %s1082
          %1085 = dma.vmem_to_hbm [thread:$0]  %s1083, 32, %s1080, %s1064
        $region56: #{_run_kernel.1} parent=35 // pred_fallthru
          _
        // Predicated region
        $region57: #{_run_kernel.1} parent=35 // pred_check
          %p1086 = pneg %p157
        $region58: #{_run_kernel.1} parent=35 // pred_check_branch
          %1088 = sbr.rel (%p1086) target = $region60
        $region59: #{_run_kernel.1} parent=35 // pred_region
          _
        $region60: #{_run_kernel.1} parent=35 // pred_fallthru
          _
      $region36: #{_run_kernel.1} parent=5 // pred_fallthru
        _
      %p1089 = scmp.le.s32.totalorder 2, %s19
      // Predicated region
      $region61: #{_run_kernel.1} parent=5 // pred_check
        %p1090 = pneg %p1089
      $region62: #{_run_kernel.1} parent=5 // pred_check_branch
        %1092 = sbr.rel (%p1090) target = $region64
      $region63: #{_run_kernel.1} parent=5 // pred_region
        %s1093 = ssub.s32 %s19, 2
        // Predicated region
        $region65: #{_run_kernel.1} parent=63 // pred_check
          %p1094 = pneg %p137
        $region66: #{_run_kernel.1} parent=63 // pred_check_branch
          %1096 = sbr.rel (%p1094) target = $region68
        $region67: #{_run_kernel.1} parent=63 // pred_region
          %s1097 = sand.u32 %s122, 1
          %s1098 = scalar_lea.sflag [#allocation5], %s1097
          %s1099 = sand.u32 %s122, 1
          %s1100 = smul.addr %s1099, 2
          %s1101 = scalar_lea.vmem [#allocation9], %s1100
          %1102 = dma.done %s1098, 32
        $region68: #{_run_kernel.1} parent=63 // pred_fallthru
          _
        // Predicated region
        $region69: #{_run_kernel.1} parent=63 // pred_check
          %p1103 = pneg %p163
        $region70: #{_run_kernel.1} parent=63 // pred_check_branch
          %1105 = sbr.rel (%p1103) target = $region72
        $region71: #{_run_kernel.1} parent=63 // pred_region
          %p1106 = scmp.lt.s32.totalorder %s25, 3
          %s1107 = scalar_select %p1106, %s25, 3
          %s1108 = smul.addr %s1107, 2
          %s1109 = smul.addr %s1108, 8
          %s1110 = scalar_lea.vmem %s5, %s1109
        $region72: #{_run_kernel.1} parent=63 // pred_fallthru
          _
      $region64: #{_run_kernel.1} parent=5 // pred_fallthru
        _
    $region6: #{_run_kernel.1} parent=1 // loop_footer
      %s23 = sadd.s32 1, %s19
    $region7: #{_run_kernel.1} parent=1 // loop_footer_branch
      %18 = sbr.rel target = $region3
    $region8: #{_run_kernel.1} parent=1 // loop_exit
      _
    %1111 = vsyncpa [#allocation4], 1
    %s1112 = scalar_lea.sflag [#allocation4], 1
    %1113 = vsyncpa %s1112, 1
    %1114 = vsyncpa [#allocation7], 1
    %1115 = vsyncpa [#allocation5], 1
    %s1116 = scalar_lea.sflag [#allocation5], 1
    %1117 = vsyncpa %s1116, 1

</llo_original>
